<compile_context>
chip_gen: v5e
topology: v5e:2x2
jax: 0.10.0
libtpu: 0.0.40
codegen_flags: <defaults>
</compile_context>

<pallas_src>
import jax
import jax.numpy as jnp
from jax.experimental import pallas as pl
from jax.experimental.pallas import tpu as pltpu

C = 201  # fixed by the module: Conv3d(201, 201, 1)


def _sr_q_dl_s_kernel(x_ref, w_ref, b_ref, res_ref, o_ref):
    # x_ref/res_ref/o_ref: (C, ts)  C on sublanes, spatial tile on lanes
    # w_ref:               (C, C)   conv weight as (C_out, C_in), resident
    # b_ref:               (C, 1)   conv bias, resident
    x = x_ref[...]
    x = jnp.where(x > 0.01, x, 0.0)                          # nn.Threshold(0.01, 0)
    y = jnp.dot(w_ref[...], x,                               # (C_out, ts) on MXU
                preferred_element_type=jnp.float32)
    o_ref[...] = (y + b_ref[...] + res_ref[...]).astype(o_ref.dtype)


def sr_q_dl_s_forward(x, x_res, weight, bias, *, ts=2048, alias_residual=False):
    """x, x_res: (N, C, D, H, W) f32.  weight: (C, C, 1, 1, 1).  bias: (C,)."""
    N, Cc, D, H, W = x.shape
    assert Cc == C
    S = D * H * W

    # (N, C, D, H, W) -> (N, C, S): pure reshape, no transpose / extra HBM pass.
    x3 = x.reshape(N, C, S)
    r3 = x_res.reshape(N, C, S)

    # Lane (spatial) tile: multiple of 128, capped at 2048 so the 3-stream x
    # 2-buffer working set (~10.6 MB) fits default scoped VMEM on all gens.
    ts = max(128, min(ts, pl.cdiv(S, 128) * 128))
    # Ensure enough grid steps to feed both v7x TensorCores and hide DMA
    # behind the pipeline; shrink the tile for small problems.
    while ts > 128 and N * pl.cdiv(S, ts) < 8:
        ts = max(128, ((ts // 2) // 128) * 128)
    n_s = pl.cdiv(S, ts)   # ragged last tile handled by Pallas (masked stores)

    w2d = weight.reshape(C, C)          # (C_out, C_in)
    b2d = bias.reshape(C, 1)            # broadcast along lanes in-kernel

    extra = {}
    if alias_residual:
        # Production: donate x_ref at the jit boundary and let the output
        # reuse its HBM buffer (saves capacity + a copy-on-donation).
        extra["input_output_aliases"] = {3: 0}

    out3 = pl.pallas_call(
        _sr_q_dl_s_kernel,
        out_shape=jax.ShapeDtypeStruct((N, C, S), jnp.float32),
        grid_spec=pltpu.PrefetchScalarGridSpec(
            num_scalar_prefetch=0,
            grid=(N, n_s),
            in_specs=[
                pl.BlockSpec((pl.Squeezed(), C, ts), lambda n, s: (n, 0, s)),  # x
                pl.BlockSpec((C, C), lambda n, s: (0, 0)),                     # weight (resident)
                pl.BlockSpec((C, 1), lambda n, s: (0, 0)),                     # bias (resident)
                pl.BlockSpec((pl.Squeezed(), C, ts), lambda n, s: (n, 0, s)),  # residual
            ],
            out_specs=pl.BlockSpec((pl.Squeezed(), C, ts), lambda n, s: (n, 0, s)),
        ),
        compiler_params=pltpu.CompilerParams(
            dimension_semantics=("parallel", "parallel")),
        cost_estimate=pl.CostEstimate(
            flops=2 * C * C * N * S,
            bytes_accessed=3 * 4 * N * C * S + 4 * C * C + 4 * C,
            transcendentals=0),
        **extra,
    )(x3, w2d, b2d, r3)

    return out3.reshape(N, C, D, H, W)


def reference_forward(x, x_res, weight, bias):
    xt = jnp.where(x > 0.01, x, 0.0)
    w2d = weight.reshape(C, C)
    y = jnp.einsum("ncdhw,oc->nodhw", xt, w2d) + bias.reshape(1, C, 1, 1, 1)
    return y + x_res


if __name__ == "__main__":
    key = jax.random.PRNGKey(0)
    k1, k2, k3, k4 = jax.random.split(key, 4)

    # Small spatial shape; channel count is fixed at 201 by the module.
    # S = 2*8*10 = 160 is NOT a multiple of 128, so this exercises the
    # ragged (masked) last-tile path removed from the wrapper.
    N, D, H, W = 2, 2, 8, 10
    x = jax.random.normal(k1, (N, C, D, H, W), dtype=jnp.float32)
    x_res = jax.random.normal(k2, (N, C, D, H, W), dtype=jnp.float32)

    # Deterministic Conv3d(201, 201, 1) parameters
    # (shapes per PyTorch: (201, 201, 1, 1, 1), (201,)).
    fan_in = C
    bound = 1.0 / jnp.sqrt(fan_in)
    weight = jax.random.uniform(k3, (C, C, 1, 1, 1), jnp.float32, -bound, bound)
    bias = jax.random.uniform(k4, (C,), jnp.float32, -bound, bound)

    out = sr_q_dl_s_forward(x, x_res, weight, bias)
    out = jax.block_until_ready(out)

    ref = reference_forward(x, x_res, weight, bias)
    assert out.shape == (N, C, D, H, W)
    assert jnp.allclose(out, ref, atol=1e-4, rtol=1e-4)

    print("KERNEL_OK")
</pallas_src>

<mosaic_0001>
module attributes {stable_mosaic.version = 11 : i64} {
  func.func @_sr_q_dl_s_kernel(%arg0: i32, %arg1: i32, %arg2: memref<1x201x128xf32, #tpu.memory_space<vmem>>, %arg3: memref<201x201xf32, #tpu.memory_space<vmem>>, %arg4: memref<201x1xf32, #tpu.memory_space<vmem>>, %arg5: memref<1x201x128xf32, #tpu.memory_space<vmem>>, %arg6: memref<1x201x128xf32, #tpu.memory_space<vmem>>) attributes {dimension_semantics = [#tpu.dimension_semantics<parallel>, #tpu.dimension_semantics<parallel>], iteration_bounds = array<i64: 2, 2>, scalar_prefetch = 0 : i64, scratch_operands = 0 : i64, tpu.core_type = #tpu.core_type<tc>, window_params = [{transform_indices = @transform_0, window_bounds = array<i64: 1, 201, 128>}, {pipeline_mode = #tpu.pipeline_mode<synchronous>, transform_indices = @transform_1, window_bounds = array<i64: 201, 201>}, {pipeline_mode = #tpu.pipeline_mode<synchronous>, transform_indices = @transform_2, window_bounds = array<i64: 201, 1>}, {transform_indices = @transform_3, window_bounds = array<i64: 1, 201, 128>}, {transform_indices = @transform_4, window_bounds = array<i64: 1, 201, 128>}]} {
    %c0 = arith.constant 0 : index
    %c0_0 = arith.constant 0 : index
    %c0_1 = arith.constant 0 : index
    %0 = vector.load %arg2[%c0, %c0_0, %c0_1] : memref<1x201x128xf32, #tpu.memory_space<vmem>>, vector<1x201x128xf32>
    %1 = vector.shape_cast %0 : vector<1x201x128xf32> to vector<201x128xf32>
    %cst = arith.constant 0.00999999977 : f32
    %2 = vector.broadcast %cst : f32 to vector<201x128xf32>
    %3 = arith.cmpf ogt, %1, %2 : vector<201x128xf32>
    %cst_2 = arith.constant 0.000000e+00 : f32
    %4 = vector.broadcast %cst_2 : f32 to vector<201x128xf32>
    %5 = arith.select %3, %1, %4 : vector<201x128xi1>, vector<201x128xf32>
    %c0_3 = arith.constant 0 : index
    %c0_4 = arith.constant 0 : index
    %6 = vector.load %arg3[%c0_3, %c0_4] : memref<201x201xf32, #tpu.memory_space<vmem>>, vector<201x201xf32>
    %cst_5 = arith.constant dense<0.000000e+00> : vector<201x128xf32>
    %7 = tpu.matmul %6, %5, %cst_5 {dimension_numbers = #tpu.dot_dimension_numbers<[1], [0], [0], [1], [0, 0, 1, 1], [], []>} : vector<201x201xf32>, vector<201x128xf32>, vector<201x128xf32> -> vector<201x128xf32>
    %c0_6 = arith.constant 0 : index
    %c0_7 = arith.constant 0 : index
    %8 = vector.load %arg4[%c0_6, %c0_7] : memref<201x1xf32, #tpu.memory_space<vmem>>, vector<201x1xf32>
    %9 = vector.broadcast %8 : vector<201x1xf32> to vector<201x128xf32>
    %10 = arith.addf %7, %9 : vector<201x128xf32>
    %c0_8 = arith.constant 0 : index
    %c0_9 = arith.constant 0 : index
    %c0_10 = arith.constant 0 : index
    %11 = vector.load %arg5[%c0_8, %c0_9, %c0_10] : memref<1x201x128xf32, #tpu.memory_space<vmem>>, vector<1x201x128xf32>
    %12 = vector.shape_cast %11 : vector<1x201x128xf32> to vector<201x128xf32>
    %13 = arith.addf %10, %12 : vector<201x128xf32>
    %c0_11 = arith.constant 0 : index
    %c0_12 = arith.constant 0 : index
    %c0_13 = arith.constant 0 : index
    %14 = vector.load %arg6[%c0_11, %c0_12, %c0_13] : memref<1x201x128xf32, #tpu.memory_space<vmem>>, vector<1x201x128xf32>
    %15 = vector.shape_cast %14 : vector<1x201x128xf32> to vector<201x128xf32>
    %16 = vector.shape_cast %13 : vector<201x128xf32> to vector<1x201x128xf32>
    tpu.vector_store %arg6[%c0_11, %c0_12, %c0_13], %16 {strides = array<i32>} : memref<1x201x128xf32, #tpu.memory_space<vmem>>, vector<1x201x128xf32>,
    return
  }
  func.func @transform_0(%arg0: i32, %arg1: i32) -> (i32, i32, i32) {
    %c0_i32 = arith.constant 0 : i32
    %c0_i32_0 = arith.constant 0 : i32
    return %arg0, %c0_i32, %arg1 : i32, i32, i32
  }
  func.func @transform_1(%arg0: i32, %arg1: i32) -> (i32, i32) {
    %c0_i32 = arith.constant 0 : i32
    %c0_i32_0 = arith.constant 0 : i32
    %c0_i32_1 = arith.constant 0 : i32
    return %c0_i32, %c0_i32_0 : i32, i32
  }
  func.func @transform_2(%arg0: i32, %arg1: i32) -> (i32, i32) {
    %c0_i32 = arith.constant 0 : i32
    %c0_i32_0 = arith.constant 0 : i32
    %c0_i32_1 = arith.constant 0 : i32
    return %c0_i32, %c0_i32_0 : i32, i32
  }
  func.func @transform_3(%arg0: i32, %arg1: i32) -> (i32, i32, i32) {
    %c0_i32 = arith.constant 0 : i32
    %c0_i32_0 = arith.constant 0 : i32
    return %arg0, %c0_i32, %arg1 : i32, i32, i32
  }
  func.func @transform_4(%arg0: i32, %arg1: i32) -> (i32, i32, i32) {
    %c0_i32 = arith.constant 0 : i32
    %c0_i32_0 = arith.constant 0 : i32
    return %arg0, %c0_i32, %arg1 : i32, i32, i32
  }
}

</mosaic_0001>

<llo_original>
// kernel: tpu_custom_call.1
$region0: #{tpu_custom_call.1}
  #allocation0 [shape = 'u32[]', space=smem, size = 0x4, offset = 0x4, fixed_abs, tag = 'smem constant byte address 0x4 - core index']
  #allocation1 [shape = 'u32[72,128]{1,0:T(1,128)}', space=vmem, size = 0x9000, scoped, tag = 'internal scratch']
  %s0 = inlined_call_operand.vmem [shape: f32[2,201,160], index: 0, kind: input, shape index: {}]
  %s1 = inlined_call_operand.vmem [shape: f32[201,201], index: 1, kind: input, shape index: {}]
  %s2 = inlined_call_operand.vmem [shape: f32[201,1], index: 2, kind: input, shape index: {}]
  %s3 = inlined_call_operand.vmem [shape: f32[2,201,160], index: 3, kind: input, shape index: {}]
  %s4 = inlined_call_operand.vmem [shape: f32[2,201,160], index: 4, kind: output, shape index: {}]
  %s5 = sld [smem:[#allocation0]]
  $region159: #{tpu_custom_call.1} parent=0
    _
  %s7 = ssub.s32 1, %s5
  %s8 = scalar_select 0, %s7, %s5
  $region1: #{tpu_custom_call.1} parent=0
    #allocation2 [shape = 'u8[212992]{0}', space=vmem, size = 0x34000, scoped, tag = 'input window, operand 0']
    #allocation3 [shape = 'u8[212992]{0}', space=vmem, size = 0x34000, scoped, tag = 'input window, operand 3']
    #allocation4 [shape = 'u8[212992]{0}', space=vmem, size = 0x34000, scoped, tag = 'output window, operand 0']
    loop: start=0, step=1, limit=6
    $region2: #{tpu_custom_call.1} parent=1 // loop_pre_header
      _
    $region3: #{tpu_custom_call.1} parent=1 // loop_header
      %s10 = sphi 0, %s14
      %p11 = scmp.ge.s32.totalorder %s10, 6
      %s17 = sphi 0, %s29
      %s18 = sphi 0, %s25
      %s19 = sphi 0, %s17
      %s20 = sphi 0, %s18
      %s21 = sphi 0, %s19
      %s22 = sphi 0, %s20
      %s34 = sphi 0, %s36
      %s37 = sphi 0, %s34
      %s38 = sphi 0, %s37
      %s54 = sphi 0, %s38
      %s58 = sphi 0, %s58
      %s60 = sphi 0, %s58
      %s61 = sphi 0, %s60
      %s75 = sphi 0, %s61
      %s79 = sphi 0, %s79
      %s81 = sphi 0, %s79
      %s82 = sphi 0, %s81
      %s96 = sphi 0, %s82
      %s104 = sphi 0, %s106
      %s107 = sphi 0, %s104
      %s108 = sphi 0, %s107
      %s124 = sphi 0, %s108
      %s132 = sphi 0, %s134
      %s135 = sphi 0, %s132
      %s136 = sphi 0, %s135
      %s152 = sphi 0, %s136
    $region4: #{tpu_custom_call.1} parent=1 // loop_header_branch
      %13 = sbr.rel (%p11) target = $region8
    $region5: #{tpu_custom_call.1} parent=1 // loop_body
      %s15 = ssub.s32 %s10, 1
      %s16 = ssub.s32 %s10, 2
      %s23 = sadd.s32 1, %s18
      %p24 = scmp.ge.s32.totalorder %s23, 2
      %s25 = scalar_select %p24, 0, %s23
      %s26 = sadd.s32 1, %s17
      %s27 = scalar_select %p24, %s26, %s17
      %p28 = scmp.ge.s32.totalorder %s27, 2
      %s29 = scalar_select %p28, 0, %s27
      %s30 = ssub.s32 %s17, %s29
      %s31 = ssub.s32 %s18, %s25
      %s32 = sor.u32 %s30, %s31
      %p33 = scmp.eq.s32.totalorder %s32, 0
      %s35 = sadd.s32 %s34, 1
      %s36 = scalar_select %p33, %s34, %s35
      %p39 = pneg %p33
      %p40 = scmp.eq.s32.totalorder %s10, 3
      %p41 = por %p39, %p40
      %p42 = scmp.ne.s32.totalorder %s34, %s37
      %p43 = scmp.eq.s32.totalorder %s10, 0
      %p44 = por %p42, %p43
      %p45 = scmp.ne.s32.totalorder %s34, %s37
      %p46 = scmp.eq.s32.totalorder %s15, 3
      %p47 = por %p45, %p46
      %p48 = scmp.ne.s32.totalorder %s37, %s38
      %p49 = scmp.eq.s32.totalorder %s15, 0
      %p50 = por %p48, %p49
      %p51 = scmp.ne.s32.totalorder %s37, %s38
      %p52 = scmp.eq.s32.totalorder %s16, 3
      %p53 = por %p51, %p52
      %p55 = scmp.ne.s32.totalorder %s38, %s54
      %p56 = scmp.eq.s32.totalorder %s16, 0
      %p57 = por %p55, %p56
      %s59 = sadd.s32 %s58, 1
      %p62 = scmp.eq.s32.totalorder %s10, 3
      %p63 = scmp.ne.s32.totalorder %s58, %s60
      %p64 = scmp.eq.s32.totalorder %s10, 0
      %p65 = por %p63, %p64
      %p66 = scmp.ne.s32.totalorder %s58, %s60
      %p67 = scmp.eq.s32.totalorder %s15, 3
      %p68 = por %p66, %p67
      %p69 = scmp.ne.s32.totalorder %s60, %s61
      %p70 = scmp.eq.s32.totalorder %s15, 0
      %p71 = por %p69, %p70
      %p72 = scmp.ne.s32.totalorder %s60, %s61
      %p73 = scmp.eq.s32.totalorder %s16, 3
      %p74 = por %p72, %p73
      %p76 = scmp.ne.s32.totalorder %s61, %s75
      %p77 = scmp.eq.s32.totalorder %s16, 0
      %p78 = por %p76, %p77
      %s80 = sadd.s32 %s79, 1
      %p83 = scmp.eq.s32.totalorder %s10, 3
      %p84 = scmp.ne.s32.totalorder %s79, %s81
      %p85 = scmp.eq.s32.totalorder %s10, 0
      %p86 = por %p84, %p85
      %p87 = scmp.ne.s32.totalorder %s79, %s81
      %p88 = scmp.eq.s32.totalorder %s15, 3
      %p89 = por %p87, %p88
      %p90 = scmp.ne.s32.totalorder %s81, %s82
      %p91 = scmp.eq.s32.totalorder %s15, 0
      %p92 = por %p90, %p91
      %p93 = scmp.ne.s32.totalorder %s81, %s82
      %p94 = scmp.eq.s32.totalorder %s16, 3
      %p95 = por %p93, %p94
      %p97 = scmp.ne.s32.totalorder %s82, %s96
      %p98 = scmp.eq.s32.totalorder %s16, 0
      %p99 = por %p97, %p98
      %s100 = ssub.s32 %s17, %s29
      %s101 = ssub.s32 %s18, %s25
      %s102 = sor.u32 %s100, %s101
      %p103 = scmp.eq.s32.totalorder %s102, 0
      %s105 = sadd.s32 %s104, 1
      %s106 = scalar_select %p103, %s104, %s105
      %p109 = pneg %p103
      %p110 = scmp.eq.s32.totalorder %s10, 3
      %p111 = por %p109, %p110
      %p112 = scmp.ne.s32.totalorder %s104, %s107
      %p113 = scmp.eq.s32.totalorder %s10, 0
      %p114 = por %p112, %p113
      %p115 = scmp.ne.s32.totalorder %s104, %s107
      %p116 = scmp.eq.s32.totalorder %s15, 3
      %p117 = por %p115, %p116
      %p118 = scmp.ne.s32.totalorder %s107, %s108
      %p119 = scmp.eq.s32.totalorder %s15, 0
      %p120 = por %p118, %p119
      %p121 = scmp.ne.s32.totalorder %s107, %s108
      %p122 = scmp.eq.s32.totalorder %s16, 3
      %p123 = por %p121, %p122
      %p125 = scmp.ne.s32.totalorder %s108, %s124
      %p126 = scmp.eq.s32.totalorder %s16, 0
      %p127 = por %p125, %p126
      %s128 = ssub.s32 %s17, %s29
      %s129 = ssub.s32 %s18, %s25
      %s130 = sor.u32 %s128, %s129
      %p131 = scmp.eq.s32.totalorder %s130, 0
      %s133 = sadd.s32 %s132, 1
      %s134 = scalar_select %p131, %s132, %s133
      %p137 = pneg %p131
      %p138 = scmp.eq.s32.totalorder %s10, 3
      %p139 = por %p137, %p138
      %p140 = scmp.ne.s32.totalorder %s132, %s135
      %p141 = scmp.eq.s32.totalorder %s10, 0
      %p142 = por %p140, %p141
      %p143 = scmp.ne.s32.totalorder %s132, %s135
      %p144 = scmp.eq.s32.totalorder %s15, 3
      %p145 = por %p143, %p144
      %p146 = scmp.ne.s32.totalorder %s135, %s136
      %p147 = scmp.eq.s32.totalorder %s15, 0
      %p148 = por %p146, %p147
      %p149 = scmp.ne.s32.totalorder %s135, %s136
      %p150 = scmp.eq.s32.totalorder %s16, 3
      %p151 = por %p149, %p150
      %p153 = scmp.ne.s32.totalorder %s136, %s152
      %p154 = scmp.eq.s32.totalorder %s16, 0
      %p155 = por %p153, %p154
      %p156 = scmp.le.s32.totalorder 1, %s10
      %p157 = scmp.lt.s32.totalorder %s10, 5
      %p158 = pnand %p156, %p157
      %p159 = pneg %p158
      // Predicated region
      $region9: #{tpu_custom_call.1} parent=5 // pred_check
        _
      $region10: #{tpu_custom_call.1} parent=5 // pred_check_branch
        %161 = sbr.rel (%p158) target = $region12
      $region11: #{tpu_custom_call.1} parent=5 // pred_region
        %s162 = ssub.s32 %s10, 1
        // Predicated region
        $region13: #{tpu_custom_call.1} parent=11 // pred_check
          %p163 = pneg %p71
        $region14: #{tpu_custom_call.1} parent=11 // pred_check_branch
          %165 = sbr.rel (%p163) target = $region16
        $region15: #{tpu_custom_call.1} parent=11 // pred_region
          _
        $region16: #{tpu_custom_call.1} parent=11 // pred_fallthru
          _
        // Predicated region
        $region17: #{tpu_custom_call.1} parent=11 // pred_check
          %p166 = pneg %p92
        $region18: #{tpu_custom_call.1} parent=11 // pred_check_branch
          %168 = sbr.rel (%p166) target = $region20
        $region19: #{tpu_custom_call.1} parent=11 // pred_region
          _
        $region20: #{tpu_custom_call.1} parent=11 // pred_fallthru
          _
      $region12: #{tpu_custom_call.1} parent=5 // pred_fallthru
        _
      %p169 = scmp.lt.s32.totalorder %s10, 4
      // Predicated region
      $region21: #{tpu_custom_call.1} parent=5 // pred_check
        %p170 = pneg %p169
      $region22: #{tpu_custom_call.1} parent=5 // pred_check_branch
        %172 = sbr.rel (%p170) target = $region24
      $region23: #{tpu_custom_call.1} parent=5 // pred_region
        // Predicated region
        $region25: #{tpu_custom_call.1} parent=23 // pred_check
          %p173 = pneg %p44
        $region26: #{tpu_custom_call.1} parent=23 // pred_check_branch
          %175 = sbr.rel (%p173) target = $region28
        $region27: #{tpu_custom_call.1} parent=23 // pred_region
          %s176 = sand.u32 %s34, 1
          %s177 = sand.u32 %s34, 1
          %s178 = smul.addr %s177, 208
          %s179 = scalar_lea.vmem [#allocation2], %s178
          %s180 = smul.addr %s17, 52
          %s181 = sadd.s32 %s18, %s180
          %s182 = smul.addr %s181, 8
          %s183 = scalar_lea.vmem %s0, %s182
          // Predicated region
          $region29: #{tpu_custom_call.1} parent=27 // pred_check
            _
          $region30: #{tpu_custom_call.1} parent=27 // pred_check_branch
            %185 = sbr.rel (0) target = $region32
          $region31: #{tpu_custom_call.1} parent=27 // pred_region
            // Predicated region
            $region33: #{tpu_custom_call.1} parent=31 // pred_check
              _
            $region34: #{tpu_custom_call.1} parent=31 // pred_check_branch
              %187 = sbr.rel (0) target = $region36
            $region35: #{tpu_custom_call.1} parent=31 // pred_region
              // Predicated region
              $region48: #{tpu_custom_call.1} parent=35 // pred_check
                _
              $region49: #{tpu_custom_call.1} parent=35 // pred_check_branch
                %253 = sbr.rel (0) target = $region51
              $region50: #{tpu_custom_call.1} parent=35 // pred_region
                loop: start=0, step=1, limit=1
                $region52: #{tpu_custom_call.1} parent=50 // loop_pre_header
                  _
                $region53: #{tpu_custom_call.1} parent=50 // loop_header
                  %s255 = sphi 0, %s259
                  %p256 = scmp.ge.s32.totalorder %s255, 1
                  %s260 = sphi %s183, %s183
                  %s261 = sphi %s179, %s179
                $region54: #{tpu_custom_call.1} parent=50 // loop_header_branch
                  %258 = sbr.rel (%p256) target = $region58
                $region55: #{tpu_custom_call.1} parent=50 // loop_body
                  %v262 = vld [vmem:[%s260] sm:$0xff]
                  %263 = vst [vmem:[%s261] sm:$0xff] %v262
                  %v264 = vld [vmem:[%s260 + $0x10] sm:$0xff]
                  %265 = vst [vmem:[%s261 + $0x8] sm:$0xff] %v264
                  %v266 = vld [vmem:[%s260 + $0x20] sm:$0xff]
                  %267 = vst [vmem:[%s261 + $0x10] sm:$0xff] %v266
                  %v268 = vld [vmem:[%s260 + $0x30] sm:$0xff]
                  %269 = vst [vmem:[%s261 + $0x18] sm:$0xff] %v268
                  %v270 = vld [vmem:[%s260 + $0x40] sm:$0xff]
                  %271 = vst [vmem:[%s261 + $0x20] sm:$0xff] %v270
                  %v272 = vld [vmem:[%s260 + $0x50] sm:$0xff]
                  %273 = vst [vmem:[%s261 + $0x28] sm:$0xff] %v272
                  %v274 = vld [vmem:[%s260 + $0x60] sm:$0xff]
                  %275 = vst [vmem:[%s261 + $0x30] sm:$0xff] %v274
                  %v276 = vld [vmem:[%s260 + $0x70] sm:$0xff]
                  %277 = vst [vmem:[%s261 + $0x38] sm:$0xff] %v276
                  %v278 = vld [vmem:[%s260 + $0x80] sm:$0xff]
                  %279 = vst [vmem:[%s261 + $0x40] sm:$0xff] %v278
                  %v280 = vld [vmem:[%s260 + $0x90] sm:$0xff]
                  %281 = vst [vmem:[%s261 + $0x48] sm:$0xff] %v280
                  %v282 = vld [vmem:[%s260 + $0xa0] sm:$0xff]
                  %283 = vst [vmem:[%s261 + $0x50] sm:$0xff] %v282
                  %v284 = vld [vmem:[%s260 + $0xb0] sm:$0xff]
                  %285 = vst [vmem:[%s261 + $0x58] sm:$0xff] %v284
                  %v286 = vld [vmem:[%s260 + $0xc0] sm:$0xff]
                  %287 = vst [vmem:[%s261 + $0x60] sm:$0xff] %v286
                  %v288 = vld [vmem:[%s260 + $0xd0] sm:$0xff]
                  %289 = vst [vmem:[%s261 + $0x68] sm:$0xff] %v288
                  %v290 = vld [vmem:[%s260 + $0xe0] sm:$0xff]
                  %291 = vst [vmem:[%s261 + $0x70] sm:$0xff] %v290
                  %v292 = vld [vmem:[%s260 + $0xf0] sm:$0xff]
                  %293 = vst [vmem:[%s261 + $0x78] sm:$0xff] %v292
                  %v294 = vld [vmem:[%s260 + $0x100] sm:$0xff]
                  %295 = vst [vmem:[%s261 + $0x80] sm:$0xff] %v294
                  %v296 = vld [vmem:[%s260 + $0x110] sm:$0xff]
                  %297 = vst [vmem:[%s261 + $0x88] sm:$0xff] %v296
                  %v298 = vld [vmem:[%s260 + $0x120] sm:$0xff]
                  %299 = vst [vmem:[%s261 + $0x90] sm:$0xff] %v298
                  %v300 = vld [vmem:[%s260 + $0x130] sm:$0xff]
                  %301 = vst [vmem:[%s261 + $0x98] sm:$0xff] %v300
                  %v302 = vld [vmem:[%s260 + $0x140] sm:$0xff]
                  %303 = vst [vmem:[%s261 + $0xa0] sm:$0xff] %v302
                  %v304 = vld [vmem:[%s260 + $0x150] sm:$0xff]
                  %305 = vst [vmem:[%s261 + $0xa8] sm:$0xff] %v304
                  %v306 = vld [vmem:[%s260 + $0x160] sm:$0xff]
                  %307 = vst [vmem:[%s261 + $0xb0] sm:$0xff] %v306
                  %v308 = vld [vmem:[%s260 + $0x170] sm:$0xff]
                  %309 = vst [vmem:[%s261 + $0xb8] sm:$0xff] %v308
                  %v310 = vld [vmem:[%s260 + $0x180] sm:$0xff]
                  %311 = vst [vmem:[%s261 + $0xc0] sm:$0xff] %v310
                  %v312 = vld [vmem:[%s260 + $0x190] sm:$0xff]
                  %313 = vst [vmem:[%s261 + $0xc8] sm:$0xff] %v312
                $region56: #{tpu_custom_call.1} parent=50 // loop_footer
                  %s259 = sadd.s32 1, %s255
                $region57: #{tpu_custom_call.1} parent=50 // loop_footer_branch
                  %254 = sbr.rel target = $region53
                $region58: #{tpu_custom_call.1} parent=50 // loop_exit
                  _
              $region51: #{tpu_custom_call.1} parent=35 // pred_fallthru
                _
              // Predicated region
              $region59: #{tpu_custom_call.1} parent=35 // pred_check
                _
              $region60: #{tpu_custom_call.1} parent=35 // pred_check_branch
                %315 = sbr.rel target = $region62
              $region61: #{tpu_custom_call.1} parent=35 // pred_region
                _
              $region62: #{tpu_custom_call.1} parent=35 // pred_fallthru
                _
            $region36: #{tpu_custom_call.1} parent=31 // pred_fallthru
              _
            // Predicated region
            $region37: #{tpu_custom_call.1} parent=31 // pred_check
              _
            $region38: #{tpu_custom_call.1} parent=31 // pred_check_branch
              %189 = sbr.rel target = $region40
            $region39: #{tpu_custom_call.1} parent=31 // pred_region
              %s191 = ssub.s32 256, 1
              loop: start=0, step=1, limit=1
              $region41: #{tpu_custom_call.1} parent=39 // loop_pre_header
                _
              $region42: #{tpu_custom_call.1} parent=39 // loop_header
                %s193 = sphi 0, %s197
                %p194 = scmp.ge.s32.totalorder %s193, 1
                %s198 = sphi %s183, %s183
                %s199 = sphi %s179, %s179
              $region43: #{tpu_custom_call.1} parent=39 // loop_header_branch
                %196 = sbr.rel (%p194) target = $region47
              $region44: #{tpu_custom_call.1} parent=39 // loop_body
                %v200 = vld [vmem:[%s198] sm:%s191]
                %201 = vst [vmem:[%s199] sm:%s191] %v200
                %v202 = vld [vmem:[%s198 + $0x10] sm:%s191]
                %203 = vst [vmem:[%s199 + $0x8] sm:%s191] %v202
                %v204 = vld [vmem:[%s198 + $0x20] sm:%s191]
                %205 = vst [vmem:[%s199 + $0x10] sm:%s191] %v204
                %v206 = vld [vmem:[%s198 + $0x30] sm:%s191]
                %207 = vst [vmem:[%s199 + $0x18] sm:%s191] %v206
                %v208 = vld [vmem:[%s198 + $0x40] sm:%s191]
                %209 = vst [vmem:[%s199 + $0x20] sm:%s191] %v208
                %v210 = vld [vmem:[%s198 + $0x50] sm:%s191]
                %211 = vst [vmem:[%s199 + $0x28] sm:%s191] %v210
                %v212 = vld [vmem:[%s198 + $0x60] sm:%s191]
                %213 = vst [vmem:[%s199 + $0x30] sm:%s191] %v212
                %v214 = vld [vmem:[%s198 + $0x70] sm:%s191]
                %215 = vst [vmem:[%s199 + $0x38] sm:%s191] %v214
                %v216 = vld [vmem:[%s198 + $0x80] sm:%s191]
                %217 = vst [vmem:[%s199 + $0x40] sm:%s191] %v216
                %v218 = vld [vmem:[%s198 + $0x90] sm:%s191]
                %219 = vst [vmem:[%s199 + $0x48] sm:%s191] %v218
                %v220 = vld [vmem:[%s198 + $0xa0] sm:%s191]
                %221 = vst [vmem:[%s199 + $0x50] sm:%s191] %v220
                %v222 = vld [vmem:[%s198 + $0xb0] sm:%s191]
                %223 = vst [vmem:[%s199 + $0x58] sm:%s191] %v222
                %v224 = vld [vmem:[%s198 + $0xc0] sm:%s191]
                %225 = vst [vmem:[%s199 + $0x60] sm:%s191] %v224
                %v226 = vld [vmem:[%s198 + $0xd0] sm:%s191]
                %227 = vst [vmem:[%s199 + $0x68] sm:%s191] %v226
                %v228 = vld [vmem:[%s198 + $0xe0] sm:%s191]
                %229 = vst [vmem:[%s199 + $0x70] sm:%s191] %v228
                %v230 = vld [vmem:[%s198 + $0xf0] sm:%s191]
                %231 = vst [vmem:[%s199 + $0x78] sm:%s191] %v230
                %v232 = vld [vmem:[%s198 + $0x100] sm:%s191]
                %233 = vst [vmem:[%s199 + $0x80] sm:%s191] %v232
                %v234 = vld [vmem:[%s198 + $0x110] sm:%s191]
                %235 = vst [vmem:[%s199 + $0x88] sm:%s191] %v234
                %v236 = vld [vmem:[%s198 + $0x120] sm:%s191]
                %237 = vst [vmem:[%s199 + $0x90] sm:%s191] %v236
                %v238 = vld [vmem:[%s198 + $0x130] sm:%s191]
                %239 = vst [vmem:[%s199 + $0x98] sm:%s191] %v238
                %v240 = vld [vmem:[%s198 + $0x140] sm:%s191]
                %241 = vst [vmem:[%s199 + $0xa0] sm:%s191] %v240
                %v242 = vld [vmem:[%s198 + $0x150] sm:%s191]
                %243 = vst [vmem:[%s199 + $0xa8] sm:%s191] %v242
                %v244 = vld [vmem:[%s198 + $0x160] sm:%s191]
                %245 = vst [vmem:[%s199 + $0xb0] sm:%s191] %v244
                %v246 = vld [vmem:[%s198 + $0x170] sm:%s191]
                %247 = vst [vmem:[%s199 + $0xb8] sm:%s191] %v246
                %v248 = vld [vmem:[%s198 + $0x180] sm:%s191]
                %249 = vst [vmem:[%s199 + $0xc0] sm:%s191] %v248
                %v250 = vld [vmem:[%s198 + $0x190] sm:%s191]
                %251 = vst [vmem:[%s199 + $0xc8] sm:%s191] %v250
              $region45: #{tpu_custom_call.1} parent=39 // loop_footer
                %s197 = sadd.s32 1, %s193
              $region46: #{tpu_custom_call.1} parent=39 // loop_footer_branch
                %192 = sbr.rel target = $region42
              $region47: #{tpu_custom_call.1} parent=39 // loop_exit
                _
            $region40: #{tpu_custom_call.1} parent=31 // pred_fallthru
              _
          $region32: #{tpu_custom_call.1} parent=27 // pred_fallthru
            _
          %316 = vnop
        $region28: #{tpu_custom_call.1} parent=23 // pred_fallthru
          _
        // Predicated region
        $region63: #{tpu_custom_call.1} parent=23 // pred_check
          %p317 = pneg %p114
        $region64: #{tpu_custom_call.1} parent=23 // pred_check_branch
          %319 = sbr.rel (%p317) target = $region66
        $region65: #{tpu_custom_call.1} parent=23 // pred_region
          %s320 = sand.u32 %s104, 1
          %s321 = sand.u32 %s104, 1
          %s322 = smul.addr %s321, 208
          %s323 = scalar_lea.vmem [#allocation3], %s322
          %s324 = smul.addr %s17, 52
          %s325 = sadd.s32 %s18, %s324
          %s326 = smul.addr %s325, 8
          %s327 = scalar_lea.vmem %s3, %s326
          // Predicated region
          $region67: #{tpu_custom_call.1} parent=65 // pred_check
            _
          $region68: #{tpu_custom_call.1} parent=65 // pred_check_branch
            %329 = sbr.rel (0) target = $region70
          $region69: #{tpu_custom_call.1} parent=65 // pred_region
            // Predicated region
            $region71: #{tpu_custom_call.1} parent=69 // pred_check
              _
            $region72: #{tpu_custom_call.1} parent=69 // pred_check_branch
              %331 = sbr.rel (0) target = $region74
            $region73: #{tpu_custom_call.1} parent=69 // pred_region
              // Predicated region
              $region86: #{tpu_custom_call.1} parent=73 // pred_check
                _
              $region87: #{tpu_custom_call.1} parent=73 // pred_check_branch
                %397 = sbr.rel (0) target = $region89
              $region88: #{tpu_custom_call.1} parent=73 // pred_region
                loop: start=0, step=1, limit=1
                $region90: #{tpu_custom_call.1} parent=88 // loop_pre_header
                  _
                $region91: #{tpu_custom_call.1} parent=88 // loop_header
                  %s399 = sphi 0, %s403
                  %p400 = scmp.ge.s32.totalorder %s399, 1
                  %s404 = sphi %s327, %s327
                  %s405 = sphi %s323, %s323
                $region92: #{tpu_custom_call.1} parent=88 // loop_header_branch
                  %402 = sbr.rel (%p400) target = $region96
                $region93: #{tpu_custom_call.1} parent=88 // loop_body
                  %v406 = vld [vmem:[%s404] sm:$0xff]
                  %407 = vst [vmem:[%s405] sm:$0xff] %v406
                  %v408 = vld [vmem:[%s404 + $0x10] sm:$0xff]
                  %409 = vst [vmem:[%s405 + $0x8] sm:$0xff] %v408
                  %v410 = vld [vmem:[%s404 + $0x20] sm:$0xff]
                  %411 = vst [vmem:[%s405 + $0x10] sm:$0xff] %v410
                  %v412 = vld [vmem:[%s404 + $0x30] sm:$0xff]
                  %413 = vst [vmem:[%s405 + $0x18] sm:$0xff] %v412
                  %v414 = vld [vmem:[%s404 + $0x40] sm:$0xff]
                  %415 = vst [vmem:[%s405 + $0x20] sm:$0xff] %v414
                  %v416 = vld [vmem:[%s404 + $0x50] sm:$0xff]
                  %417 = vst [vmem:[%s405 + $0x28] sm:$0xff] %v416
                  %v418 = vld [vmem:[%s404 + $0x60] sm:$0xff]
                  %419 = vst [vmem:[%s405 + $0x30] sm:$0xff] %v418
                  %v420 = vld [vmem:[%s404 + $0x70] sm:$0xff]
                  %421 = vst [vmem:[%s405 + $0x38] sm:$0xff] %v420
                  %v422 = vld [vmem:[%s404 + $0x80] sm:$0xff]
                  %423 = vst [vmem:[%s405 + $0x40] sm:$0xff] %v422
                  %v424 = vld [vmem:[%s404 + $0x90] sm:$0xff]
                  %425 = vst [vmem:[%s405 + $0x48] sm:$0xff] %v424
                  %v426 = vld [vmem:[%s404 + $0xa0] sm:$0xff]
                  %427 = vst [vmem:[%s405 + $0x50] sm:$0xff] %v426
                  %v428 = vld [vmem:[%s404 + $0xb0] sm:$0xff]
                  %429 = vst [vmem:[%s405 + $0x58] sm:$0xff] %v428
                  %v430 = vld [vmem:[%s404 + $0xc0] sm:$0xff]
                  %431 = vst [vmem:[%s405 + $0x60] sm:$0xff] %v430
                  %v432 = vld [vmem:[%s404 + $0xd0] sm:$0xff]
                  %433 = vst [vmem:[%s405 + $0x68] sm:$0xff] %v432
                  %v434 = vld [vmem:[%s404 + $0xe0] sm:$0xff]
                  %435 = vst [vmem:[%s405 + $0x70] sm:$0xff] %v434
                  %v436 = vld [vmem:[%s404 + $0xf0] sm:$0xff]
                  %437 = vst [vmem:[%s405 + $0x78] sm:$0xff] %v436
                  %v438 = vld [vmem:[%s404 + $0x100] sm:$0xff]
                  %439 = vst [vmem:[%s405 + $0x80] sm:$0xff] %v438
                  %v440 = vld [vmem:[%s404 + $0x110] sm:$0xff]
                  %441 = vst [vmem:[%s405 + $0x88] sm:$0xff] %v440
                  %v442 = vld [vmem:[%s404 + $0x120] sm:$0xff]
                  %443 = vst [vmem:[%s405 + $0x90] sm:$0xff] %v442
                  %v444 = vld [vmem:[%s404 + $0x130] sm:$0xff]
                  %445 = vst [vmem:[%s405 + $0x98] sm:$0xff] %v444
                  %v446 = vld [vmem:[%s404 + $0x140] sm:$0xff]
                  %447 = vst [vmem:[%s405 + $0xa0] sm:$0xff] %v446
                  %v448 = vld [vmem:[%s404 + $0x150] sm:$0xff]
                  %449 = vst [vmem:[%s405 + $0xa8] sm:$0xff] %v448
                  %v450 = vld [vmem:[%s404 + $0x160] sm:$0xff]
                  %451 = vst [vmem:[%s405 + $0xb0] sm:$0xff] %v450
                  %v452 = vld [vmem:[%s404 + $0x170] sm:$0xff]
                  %453 = vst [vmem:[%s405 + $0xb8] sm:$0xff] %v452
                  %v454 = vld [vmem:[%s404 + $0x180] sm:$0xff]
                  %455 = vst [vmem:[%s405 + $0xc0] sm:$0xff] %v454
                  %v456 = vld [vmem:[%s404 + $0x190] sm:$0xff]
                  %457 = vst [vmem:[%s405 + $0xc8] sm:$0xff] %v456
                $region94: #{tpu_custom_call.1} parent=88 // loop_footer
                  %s403 = sadd.s32 1, %s399
                $region95: #{tpu_custom_call.1} parent=88 // loop_footer_branch
                  %398 = sbr.rel target = $region91
                $region96: #{tpu_custom_call.1} parent=88 // loop_exit
                  _
              $region89: #{tpu_custom_call.1} parent=73 // pred_fallthru
                _
              // Predicated region
              $region97: #{tpu_custom_call.1} parent=73 // pred_check
                _
              $region98: #{tpu_custom_call.1} parent=73 // pred_check_branch
                %459 = sbr.rel target = $region100
              $region99: #{tpu_custom_call.1} parent=73 // pred_region
                _
              $region100: #{tpu_custom_call.1} parent=73 // pred_fallthru
                _
            $region74: #{tpu_custom_call.1} parent=69 // pred_fallthru
              _
            // Predicated region
            $region75: #{tpu_custom_call.1} parent=69 // pred_check
              _
            $region76: #{tpu_custom_call.1} parent=69 // pred_check_branch
              %333 = sbr.rel target = $region78
            $region77: #{tpu_custom_call.1} parent=69 // pred_region
              %s335 = ssub.s32 256, 1
              loop: start=0, step=1, limit=1
              $region79: #{tpu_custom_call.1} parent=77 // loop_pre_header
                _
              $region80: #{tpu_custom_call.1} parent=77 // loop_header
                %s337 = sphi 0, %s341
                %p338 = scmp.ge.s32.totalorder %s337, 1
                %s342 = sphi %s327, %s327
                %s343 = sphi %s323, %s323
              $region81: #{tpu_custom_call.1} parent=77 // loop_header_branch
                %340 = sbr.rel (%p338) target = $region85
              $region82: #{tpu_custom_call.1} parent=77 // loop_body
                %v344 = vld [vmem:[%s342] sm:%s335]
                %345 = vst [vmem:[%s343] sm:%s335] %v344
                %v346 = vld [vmem:[%s342 + $0x10] sm:%s335]
                %347 = vst [vmem:[%s343 + $0x8] sm:%s335] %v346
                %v348 = vld [vmem:[%s342 + $0x20] sm:%s335]
                %349 = vst [vmem:[%s343 + $0x10] sm:%s335] %v348
                %v350 = vld [vmem:[%s342 + $0x30] sm:%s335]
                %351 = vst [vmem:[%s343 + $0x18] sm:%s335] %v350
                %v352 = vld [vmem:[%s342 + $0x40] sm:%s335]
                %353 = vst [vmem:[%s343 + $0x20] sm:%s335] %v352
                %v354 = vld [vmem:[%s342 + $0x50] sm:%s335]
                %355 = vst [vmem:[%s343 + $0x28] sm:%s335] %v354
                %v356 = vld [vmem:[%s342 + $0x60] sm:%s335]
                %357 = vst [vmem:[%s343 + $0x30] sm:%s335] %v356
                %v358 = vld [vmem:[%s342 + $0x70] sm:%s335]
                %359 = vst [vmem:[%s343 + $0x38] sm:%s335] %v358
                %v360 = vld [vmem:[%s342 + $0x80] sm:%s335]
                %361 = vst [vmem:[%s343 + $0x40] sm:%s335] %v360
                %v362 = vld [vmem:[%s342 + $0x90] sm:%s335]
                %363 = vst [vmem:[%s343 + $0x48] sm:%s335] %v362
                %v364 = vld [vmem:[%s342 + $0xa0] sm:%s335]
                %365 = vst [vmem:[%s343 + $0x50] sm:%s335] %v364
                %v366 = vld [vmem:[%s342 + $0xb0] sm:%s335]
                %367 = vst [vmem:[%s343 + $0x58] sm:%s335] %v366
                %v368 = vld [vmem:[%s342 + $0xc0] sm:%s335]
                %369 = vst [vmem:[%s343 + $0x60] sm:%s335] %v368
                %v370 = vld [vmem:[%s342 + $0xd0] sm:%s335]
                %371 = vst [vmem:[%s343 + $0x68] sm:%s335] %v370
                %v372 = vld [vmem:[%s342 + $0xe0] sm:%s335]
                %373 = vst [vmem:[%s343 + $0x70] sm:%s335] %v372
                %v374 = vld [vmem:[%s342 + $0xf0] sm:%s335]
                %375 = vst [vmem:[%s343 + $0x78] sm:%s335] %v374
                %v376 = vld [vmem:[%s342 + $0x100] sm:%s335]
                %377 = vst [vmem:[%s343 + $0x80] sm:%s335] %v376
                %v378 = vld [vmem:[%s342 + $0x110] sm:%s335]
                %379 = vst [vmem:[%s343 + $0x88] sm:%s335] %v378
                %v380 = vld [vmem:[%s342 + $0x120] sm:%s335]
                %381 = vst [vmem:[%s343 + $0x90] sm:%s335] %v380
                %v382 = vld [vmem:[%s342 + $0x130] sm:%s335]
                %383 = vst [vmem:[%s343 + $0x98] sm:%s335] %v382
                %v384 = vld [vmem:[%s342 + $0x140] sm:%s335]
                %385 = vst [vmem:[%s343 + $0xa0] sm:%s335] %v384
                %v386 = vld [vmem:[%s342 + $0x150] sm:%s335]
                %387 = vst [vmem:[%s343 + $0xa8] sm:%s335] %v386
                %v388 = vld [vmem:[%s342 + $0x160] sm:%s335]
                %389 = vst [vmem:[%s343 + $0xb0] sm:%s335] %v388
                %v390 = vld [vmem:[%s342 + $0x170] sm:%s335]
                %391 = vst [vmem:[%s343 + $0xb8] sm:%s335] %v390
                %v392 = vld [vmem:[%s342 + $0x180] sm:%s335]
                %393 = vst [vmem:[%s343 + $0xc0] sm:%s335] %v392
                %v394 = vld [vmem:[%s342 + $0x190] sm:%s335]
                %395 = vst [vmem:[%s343 + $0xc8] sm:%s335] %v394
              $region83: #{tpu_custom_call.1} parent=77 // loop_footer
                %s341 = sadd.s32 1, %s337
              $region84: #{tpu_custom_call.1} parent=77 // loop_footer_branch
                %336 = sbr.rel target = $region80
              $region85: #{tpu_custom_call.1} parent=77 // loop_exit
                _
            $region78: #{tpu_custom_call.1} parent=69 // pred_fallthru
              _
          $region70: #{tpu_custom_call.1} parent=65 // pred_fallthru
            _
          %460 = vnop
        $region66: #{tpu_custom_call.1} parent=23 // pred_fallthru
          _
      $region24: #{tpu_custom_call.1} parent=5 // pred_fallthru
        _
      %p461 = scmp.le.s32.totalorder 1, %s10
      %p462 = scmp.lt.s32.totalorder %s10, 5
      %p463 = pnand %p461, %p462
      %p464 = pneg %p463
      // Predicated region
      $region101: #{tpu_custom_call.1} parent=5 // pred_check
        _
      $region102: #{tpu_custom_call.1} parent=5 // pred_check_branch
        %466 = sbr.rel (%p463) target = $region104
      $region103: #{tpu_custom_call.1} parent=5 // pred_region
        %s467 = ssub.s32 %s10, 1
        %s468 = sand.u32 %s37, 1
        %s469 = sand.u32 %s37, 1
        %s470 = smul.addr %s469, 208
        %s471 = scalar_lea.vmem [#allocation2], %s470
        // Predicated region
        $region105: #{tpu_custom_call.1} parent=103 // pred_check
          %p472 = pneg %p50
        $region106: #{tpu_custom_call.1} parent=103 // pred_check_branch
          %474 = sbr.rel (%p472) target = $region108
        $region107: #{tpu_custom_call.1} parent=103 // pred_region
          _
        $region108: #{tpu_custom_call.1} parent=103 // pred_fallthru
          _
        %s475 = sand.u32 %s107, 1
        %s476 = sand.u32 %s107, 1
        %s477 = smul.addr %s476, 208
        %s478 = scalar_lea.vmem [#allocation3], %s477
        // Predicated region
        $region109: #{tpu_custom_call.1} parent=103 // pred_check
          %p479 = pneg %p120
        $region110: #{tpu_custom_call.1} parent=103 // pred_check_branch
          %481 = sbr.rel (%p479) target = $region112
        $region111: #{tpu_custom_call.1} parent=103 // pred_region
          _
        $region112: #{tpu_custom_call.1} parent=103 // pred_fallthru
          _
        %s482 = sand.u32 %s37, 1
        %s483 = sand.u32 %s37, 1
        %s484 = smul.addr %s483, 208
        %s485 = scalar_lea.vmem [#allocation2], %s484
        %p486 = pneg %p50
        %p487 = pneg %p47
        %p488 = pneg %p71
        %p489 = pneg %p68
        %p490 = pneg %p92
        %p491 = pneg %p89
        %s492 = sand.u32 %s107, 1
        %s493 = sand.u32 %s107, 1
        %s494 = smul.addr %s493, 208
        %s495 = scalar_lea.vmem [#allocation3], %s494
        %p496 = pneg %p120
        %p497 = pneg %p117
        %p498 = pneg %p148
        %p499 = pneg %p145
        %s500 = sand.u32 %s135, 1
        %s501 = sand.u32 %s135, 1
        %s502 = smul.addr %s501, 208
        %s503 = scalar_lea.vmem [#allocation4], %s502
        %v504 = vld [vmem:[%s471] sm:$0xff]
        %v505 = vld [vmem:[%s471 + $0x8] sm:$0xff]
        %v506 = vld [vmem:[%s471 + $0x10] sm:$0xff]
        %v507 = vld [vmem:[%s471 + $0x18] sm:$0xff]
        %v508 = vld [vmem:[%s471 + $0x20] sm:$0xff]
        %v509 = vld [vmem:[%s471 + $0x28] sm:$0xff]
        %v510 = vld [vmem:[%s471 + $0x30] sm:$0xff]
        %v511 = vld [vmem:[%s471 + $0x38] sm:$0xff]
        %v512 = vld [vmem:[%s471 + $0x40] sm:$0xff]
        %v513 = vld [vmem:[%s471 + $0x48] sm:$0xff]
        %v514 = vld [vmem:[%s471 + $0x50] sm:$0xff]
        %v515 = vld [vmem:[%s471 + $0x58] sm:$0xff]
        %v516 = vld [vmem:[%s471 + $0x60] sm:$0xff]
        %v517 = vld [vmem:[%s471 + $0x68] sm:$0xff]
        %v518 = vld [vmem:[%s471 + $0x70] sm:$0xff]
        %v519 = vld [vmem:[%s471 + $0x78] sm:$0xff]
        %v520 = vld [vmem:[%s471 + $0x80] sm:$0xff]
        %v521 = vld [vmem:[%s471 + $0x88] sm:$0xff]
        %v522 = vld [vmem:[%s471 + $0x90] sm:$0xff]
        %v523 = vld [vmem:[%s471 + $0x98] sm:$0xff]
        %v524 = vld [vmem:[%s471 + $0xa0] sm:$0xff]
        %v525 = vld [vmem:[%s471 + $0xa8] sm:$0xff]
        %v526 = vld [vmem:[%s471 + $0xb0] sm:$0xff]
        %v527 = vld [vmem:[%s471 + $0xb8] sm:$0xff]
        %v528 = vld [vmem:[%s471 + $0xc0] sm:$0xff]
        %v529 = vld [vmem:[%s471 + $0xc8] sm:$0x1]
        %vm530 = vcmp.gt.f32.partialorder %v504, 0.01
        %vm531 = vcmp.gt.f32.partialorder %v505, 0.01
        %vm532 = vcmp.gt.f32.partialorder %v506, 0.01
        %vm533 = vcmp.gt.f32.partialorder %v507, 0.01
        %vm534 = vcmp.gt.f32.partialorder %v508, 0.01
        %vm535 = vcmp.gt.f32.partialorder %v509, 0.01
        %vm536 = vcmp.gt.f32.partialorder %v510, 0.01
        %vm537 = vcmp.gt.f32.partialorder %v511, 0.01
        %vm538 = vcmp.gt.f32.partialorder %v512, 0.01
        %vm539 = vcmp.gt.f32.partialorder %v513, 0.01
        %vm540 = vcmp.gt.f32.partialorder %v514, 0.01
        %vm541 = vcmp.gt.f32.partialorder %v515, 0.01
        %vm542 = vcmp.gt.f32.partialorder %v516, 0.01
        %vm543 = vcmp.gt.f32.partialorder %v517, 0.01
        %vm544 = vcmp.gt.f32.partialorder %v518, 0.01
        %vm545 = vcmp.gt.f32.partialorder %v519, 0.01
        %vm546 = vcmp.gt.f32.partialorder %v520, 0.01
        %vm547 = vcmp.gt.f32.partialorder %v521, 0.01
        %vm548 = vcmp.gt.f32.partialorder %v522, 0.01
        %vm549 = vcmp.gt.f32.partialorder %v523, 0.01
        %vm550 = vcmp.gt.f32.partialorder %v524, 0.01
        %vm551 = vcmp.gt.f32.partialorder %v525, 0.01
        %vm552 = vcmp.gt.f32.partialorder %v526, 0.01
        %vm553 = vcmp.gt.f32.partialorder %v527, 0.01
        %vm554 = vcmp.gt.f32.partialorder %v528, 0.01
        %vm555 = vcmp.gt.f32.partialorder %v529, 0.01
        %v556 = vsel %vm530, %v504, 0.0
        %v557 = vsel %vm531, %v505, 0.0
        %v558 = vsel %vm532, %v506, 0.0
        %v559 = vsel %vm533, %v507, 0.0
        %v560 = vsel %vm534, %v508, 0.0
        %v561 = vsel %vm535, %v509, 0.0
        %v562 = vsel %vm536, %v510, 0.0
        %v563 = vsel %vm537, %v511, 0.0
        %v564 = vsel %vm538, %v512, 0.0
        %v565 = vsel %vm539, %v513, 0.0
        %v566 = vsel %vm540, %v514, 0.0
        %v567 = vsel %vm541, %v515, 0.0
        %v568 = vsel %vm542, %v516, 0.0
        %v569 = vsel %vm543, %v517, 0.0
        %v570 = vsel %vm544, %v518, 0.0
        %v571 = vsel %vm545, %v519, 0.0
        %v572 = vsel %vm546, %v520, 0.0
        %v573 = vsel %vm547, %v521, 0.0
        %v574 = vsel %vm548, %v522, 0.0
        %v575 = vsel %vm549, %v523, 0.0
        %v576 = vsel %vm550, %v524, 0.0
        %v577 = vsel %vm551, %v525, 0.0
        %v578 = vsel %vm552, %v526, 0.0
        %v579 = vsel %vm553, %v527, 0.0
        %v580 = vsel %vm554, %v528, 0.0
        %v581 = vsel %vm555, %v529, 0.0
        %v582 = vld [vmem:[%s1] sm:$0xff]
        %v583 = vld [vmem:[%s1 + $0x8] sm:$0xff]
        %v584 = vld [vmem:[%s1 + $0x10] sm:$0xff]
        %v585 = vld [vmem:[%s1 + $0x18] sm:$0xff]
        %v586 = vld [vmem:[%s1 + $0x20] sm:$0xff]
        %v587 = vld [vmem:[%s1 + $0x28] sm:$0xff]
        %v588 = vld [vmem:[%s1 + $0x30] sm:$0xff]
        %v589 = vld [vmem:[%s1 + $0x38] sm:$0xff]
        %v590 = vld [vmem:[%s1 + $0x40] sm:$0xff]
        %v591 = vld [vmem:[%s1 + $0x48] sm:$0xff]
        %v592 = vld [vmem:[%s1 + $0x50] sm:$0xff]
        %v593 = vld [vmem:[%s1 + $0x58] sm:$0xff]
        %v594 = vld [vmem:[%s1 + $0x60] sm:$0xff]
        %v595 = vld [vmem:[%s1 + $0x68] sm:$0xff]
        %v596 = vld [vmem:[%s1 + $0x70] sm:$0xff]
        %v597 = vld [vmem:[%s1 + $0x78] sm:$0xff]
        %v598 = vld [vmem:[%s1 + $0x80] sm:$0xff]
        %v599 = vld [vmem:[%s1 + $0x88] sm:$0xff]
        %v600 = vld [vmem:[%s1 + $0x90] sm:$0xff]
        %v601 = vld [vmem:[%s1 + $0x98] sm:$0xff]
        %v602 = vld [vmem:[%s1 + $0xa0] sm:$0xff]
        %v603 = vld [vmem:[%s1 + $0xa8] sm:$0xff]
        %v604 = vld [vmem:[%s1 + $0xb0] sm:$0xff]
        %v605 = vld [vmem:[%s1 + $0xb8] sm:$0xff]
        %v606 = vld [vmem:[%s1 + $0xc0] sm:$0xff]
        %v607 = vld [vmem:[%s1 + $0xc8] sm:$0xff]
        %v608 = vld [vmem:[%s1 + $0xd0] sm:$0xff]
        %v609 = vld [vmem:[%s1 + $0xd8] sm:$0xff]
        %v610 = vld [vmem:[%s1 + $0xe0] sm:$0xff]
        %v611 = vld [vmem:[%s1 + $0xe8] sm:$0xff]
        %v612 = vld [vmem:[%s1 + $0xf0] sm:$0xff]
        %v613 = vld [vmem:[%s1 + $0xf8] sm:$0xff]
        %v614 = vld [vmem:[%s1 + $0x100] sm:$0xff]
        %v615 = vld [vmem:[%s1 + $0x108] sm:$0xff]
        %v616 = vld [vmem:[%s1 + $0x110] sm:$0xff]
        %v617 = vld [vmem:[%s1 + $0x118] sm:$0xff]
        %v618 = vld [vmem:[%s1 + $0x120] sm:$0xff]
        %v619 = vld [vmem:[%s1 + $0x128] sm:$0xff]
        %v620 = vld [vmem:[%s1 + $0x130] sm:$0xff]
        %v621 = vld [vmem:[%s1 + $0x138] sm:$0xff]
        %v622 = vld [vmem:[%s1 + $0x140] sm:$0xff]
        %v623 = vld [vmem:[%s1 + $0x148] sm:$0xff]
        %v624 = vld [vmem:[%s1 + $0x150] sm:$0xff]
        %v625 = vld [vmem:[%s1 + $0x158] sm:$0xff]
        %v626 = vld [vmem:[%s1 + $0x160] sm:$0xff]
        %v627 = vld [vmem:[%s1 + $0x168] sm:$0xff]
        %v628 = vld [vmem:[%s1 + $0x170] sm:$0xff]
        %v629 = vld [vmem:[%s1 + $0x178] sm:$0xff]
        %v630 = vld [vmem:[%s1 + $0x180] sm:$0xff]
        %v631 = vld [vmem:[%s1 + $0x188] sm:$0xff]
        %v632 = vld [vmem:[%s1 + $0x190] sm:$0x1]
        %v633 = vld [vmem:[%s1 + $0x198] sm:$0x1]
        %v634 = vld [vmem:[%s2] sm:$0xff]
        %v635 = vld [vmem:[%s2 + $0x8] sm:$0xff]
        %v636 = vld [vmem:[%s2 + $0x10] sm:$0xff]
        %v637 = vld [vmem:[%s2 + $0x18] sm:$0xff]
        %v638 = vld [vmem:[%s2 + $0x20] sm:$0xff]
        %v639 = vld [vmem:[%s2 + $0x28] sm:$0xff]
        %v640 = vld [vmem:[%s2 + $0x30] sm:$0xff]
        %v641 = vld [vmem:[%s2 + $0x38] sm:$0xff]
        %v642 = vld [vmem:[%s2 + $0x40] sm:$0xff]
        %v643 = vld [vmem:[%s2 + $0x48] sm:$0xff]
        %v644 = vld [vmem:[%s2 + $0x50] sm:$0xff]
        %v645 = vld [vmem:[%s2 + $0x58] sm:$0xff]
        %v646 = vld [vmem:[%s2 + $0x60] sm:$0xff]
        %v647 = vld [vmem:[%s2 + $0x68] sm:$0xff]
        %v648 = vld [vmem:[%s2 + $0x70] sm:$0xff]
        %v649 = vld [vmem:[%s2 + $0x78] sm:$0xff]
        %v650 = vld [vmem:[%s2 + $0x80] sm:$0xff]
        %v651 = vld [vmem:[%s2 + $0x88] sm:$0xff]
        %v652 = vld [vmem:[%s2 + $0x90] sm:$0xff]
        %v653 = vld [vmem:[%s2 + $0x98] sm:$0xff]
        %v654 = vld [vmem:[%s2 + $0xa0] sm:$0xff]
        %v655 = vld [vmem:[%s2 + $0xa8] sm:$0xff]
        %v656 = vld [vmem:[%s2 + $0xb0] sm:$0xff]
        %v657 = vld [vmem:[%s2 + $0xb8] sm:$0xff]
        %v658 = vld [vmem:[%s2 + $0xc0] sm:$0xff]
        %v659 = vld [vmem:[%s2 + $0xc8] sm:$0x1]
        %661 = vset.pattern.permute.xlu0 0
        %662 = vperm.xlu0 %661, %v634
        %v663 = vpop.permute.xlu0 %662
        %666 = vset.pattern.permute.xlu0 0
        %667 = vperm.xlu0 %666, %v635
        %v668 = vpop.permute.xlu0 %667
        %671 = vset.pattern.permute.xlu0 0
        %672 = vperm.xlu0 %671, %v636
        %v673 = vpop.permute.xlu0 %672
        %676 = vset.pattern.permute.xlu0 0
        %677 = vperm.xlu0 %676, %v637
        %v678 = vpop.permute.xlu0 %677
        %681 = vset.pattern.permute.xlu0 0
        %682 = vperm.xlu0 %681, %v638
        %v683 = vpop.permute.xlu0 %682
        %686 = vset.pattern.permute.xlu0 0
        %687 = vperm.xlu0 %686, %v639
        %v688 = vpop.permute.xlu0 %687
        %691 = vset.pattern.permute.xlu0 0
        %692 = vperm.xlu0 %691, %v640
        %v693 = vpop.permute.xlu0 %692
        %696 = vset.pattern.permute.xlu0 0
        %697 = vperm.xlu0 %696, %v641
        %v698 = vpop.permute.xlu0 %697
        %701 = vset.pattern.permute.xlu0 0
        %702 = vperm.xlu0 %701, %v642
        %v703 = vpop.permute.xlu0 %702
        %706 = vset.pattern.permute.xlu0 0
        %707 = vperm.xlu0 %706, %v643
        %v708 = vpop.permute.xlu0 %707
        %711 = vset.pattern.permute.xlu0 0
        %712 = vperm.xlu0 %711, %v644
        %v713 = vpop.permute.xlu0 %712
        %716 = vset.pattern.permute.xlu0 0
        %717 = vperm.xlu0 %716, %v645
        %v718 = vpop.permute.xlu0 %717
        %721 = vset.pattern.permute.xlu0 0
        %722 = vperm.xlu0 %721, %v646
        %v723 = vpop.permute.xlu0 %722
        %726 = vset.pattern.permute.xlu0 0
        %727 = vperm.xlu0 %726, %v647
        %v728 = vpop.permute.xlu0 %727
        %731 = vset.pattern.permute.xlu0 0
        %732 = vperm.xlu0 %731, %v648
        %v733 = vpop.permute.xlu0 %732
        %736 = vset.pattern.permute.xlu0 0
        %737 = vperm.xlu0 %736, %v649
        %v738 = vpop.permute.xlu0 %737
        %741 = vset.pattern.permute.xlu0 0
        %742 = vperm.xlu0 %741, %v650
        %v743 = vpop.permute.xlu0 %742
        %746 = vset.pattern.permute.xlu0 0
        %747 = vperm.xlu0 %746, %v651
        %v748 = vpop.permute.xlu0 %747
        %751 = vset.pattern.permute.xlu0 0
        %752 = vperm.xlu0 %751, %v652
        %v753 = vpop.permute.xlu0 %752
        %756 = vset.pattern.permute.xlu0 0
        %757 = vperm.xlu0 %756, %v653
        %v758 = vpop.permute.xlu0 %757
        %761 = vset.pattern.permute.xlu0 0
        %762 = vperm.xlu0 %761, %v654
        %v763 = vpop.permute.xlu0 %762
        %766 = vset.pattern.permute.xlu0 0
        %767 = vperm.xlu0 %766, %v655
        %v768 = vpop.permute.xlu0 %767
        %771 = vset.pattern.permute.xlu0 0
        %772 = vperm.xlu0 %771, %v656
        %v773 = vpop.permute.xlu0 %772
        %776 = vset.pattern.permute.xlu0 0
        %777 = vperm.xlu0 %776, %v657
        %v778 = vpop.permute.xlu0 %777
        %781 = vset.pattern.permute.xlu0 0
        %782 = vperm.xlu0 %781, %v658
        %v783 = vpop.permute.xlu0 %782
        %786 = vset.pattern.permute.xlu0 0
        %787 = vperm.xlu0 %786, %v659
        %v788 = vpop.permute.xlu0 %787
        %vm790 = vcmask 596992
        %v792 = vsel %vm790, %v583, 0
        %v795 = vsel %vm790, %v585, 0
        %v798 = vsel %vm790, %v587, 0
        %v801 = vsel %vm790, %v589, 0
        %v804 = vsel %vm790, %v591, 0
        %v807 = vsel %vm790, %v593, 0
        %v810 = vsel %vm790, %v595, 0
        %v813 = vsel %vm790, %v597, 0
        %v816 = vsel %vm790, %v599, 0
        %v819 = vsel %vm790, %v601, 0
        %v822 = vsel %vm790, %v603, 0
        %v825 = vsel %vm790, %v605, 0
        %v828 = vsel %vm790, %v607, 0
        %v831 = vsel %vm790, %v609, 0
        %v834 = vsel %vm790, %v611, 0
        %v837 = vsel %vm790, %v613, 0
        %v840 = vsel %vm790, %v615, 0
        %v843 = vsel %vm790, %v617, 0
        %v846 = vsel %vm790, %v619, 0
        %v849 = vsel %vm790, %v621, 0
        %v852 = vsel %vm790, %v623, 0
        %v855 = vsel %vm790, %v625, 0
        %v858 = vsel %vm790, %v627, 0
        %v861 = vsel %vm790, %v629, 0
        %v864 = vsel %vm790, %v631, 0
        %v867 = vsel %vm790, %v633, 0
        %vm869 = vcmask 1040384
        %v871 = vsel %vm869, %v581, 0
        %873 = vmatpush.msra.mxu0 %v571
        %874 = vmatpush.msra.mxu0 %v570
        %875 = vmatpush.msra.mxu0 %v569
        %876 = vmatpush.msra.mxu0 %v568
        %877 = vmatpush.msra.mxu0 %v567
        %878 = vmatpush.msra.mxu0 %v566
        %879 = vmatpush.msra.mxu0 %v565
        %880 = vmatpush.msra.mxu0 %v564
        %881 = vmatpush.msra.mxu0 %v563
        %882 = vmatpush.msra.mxu0 %v562
        %883 = vmatpush.msra.mxu0 %v561
        %884 = vmatpush.msra.mxu0 %v560
        %885 = vmatpush.msra.mxu0 %v559
        %886 = vmatpush.msra.mxu0 %v558
        %887 = vmatpush.msra.mxu0 %v557
        %888 = vmatpush.msra.mxu0 %v556
        %889 = vmatmul.f32.gmra.mxu0 %v582
        %v890 = vpop.f32.mrf.mxu0
        %v891 = vadd.f32 %v663, %v890
        %892 = vmatmul.f32.gmra.mxu0 %v584
        %v893 = vpop.f32.mrf.mxu0
        %v894 = vadd.f32 %v668, %v893
        %895 = vmatmul.f32.gmra.mxu0 %v586
        %v896 = vpop.f32.mrf.mxu0
        %v897 = vadd.f32 %v673, %v896
        %898 = vmatmul.f32.gmra.mxu0 %v588
        %v899 = vpop.f32.mrf.mxu0
        %v900 = vadd.f32 %v678, %v899
        %901 = vmatmul.f32.gmra.mxu0 %v590
        %v902 = vpop.f32.mrf.mxu0
        %v903 = vadd.f32 %v683, %v902
        %904 = vmatmul.f32.gmra.mxu0 %v592
        %v905 = vpop.f32.mrf.mxu0
        %v906 = vadd.f32 %v688, %v905
        %907 = vmatmul.f32.gmra.mxu0 %v594
        %v908 = vpop.f32.mrf.mxu0
        %v909 = vadd.f32 %v693, %v908
        %910 = vmatmul.f32.gmra.mxu0 %v596
        %v911 = vpop.f32.mrf.mxu0
        %v912 = vadd.f32 %v698, %v911
        %913 = vmatmul.f32.gmra.mxu0 %v598
        %v914 = vpop.f32.mrf.mxu0
        %v915 = vadd.f32 %v703, %v914
        %916 = vmatmul.f32.gmra.mxu0 %v600
        %v917 = vpop.f32.mrf.mxu0
        %v918 = vadd.f32 %v708, %v917
        %919 = vmatmul.f32.gmra.mxu0 %v602
        %v920 = vpop.f32.mrf.mxu0
        %v921 = vadd.f32 %v713, %v920
        %922 = vmatmul.f32.gmra.mxu0 %v604
        %v923 = vpop.f32.mrf.mxu0
        %v924 = vadd.f32 %v718, %v923
        %925 = vmatmul.f32.gmra.mxu0 %v606
        %v926 = vpop.f32.mrf.mxu0
        %v927 = vadd.f32 %v723, %v926
        %928 = vmatmul.f32.gmra.mxu0 %v608
        %v929 = vpop.f32.mrf.mxu0
        %v930 = vadd.f32 %v728, %v929
        %931 = vmatmul.f32.gmra.mxu0 %v610
        %v932 = vpop.f32.mrf.mxu0
        %v933 = vadd.f32 %v733, %v932
        %934 = vmatmul.f32.gmra.mxu0 %v612
        %v935 = vpop.f32.mrf.mxu0
        %v936 = vadd.f32 %v738, %v935
        %937 = vmatmul.f32.gmra.mxu0 %v614
        %v938 = vpop.f32.mrf.mxu0
        %v939 = vadd.f32 %v743, %v938
        %940 = vmatmul.f32.gmra.mxu0 %v616
        %v941 = vpop.f32.mrf.mxu0
        %v942 = vadd.f32 %v748, %v941
        %943 = vmatmul.f32.gmra.mxu0 %v618
        %v944 = vpop.f32.mrf.mxu0
        %v945 = vadd.f32 %v753, %v944
        %946 = vmatmul.f32.gmra.mxu0 %v620
        %v947 = vpop.f32.mrf.mxu0
        %v948 = vadd.f32 %v758, %v947
        %949 = vmatmul.f32.gmra.mxu0 %v622
        %v950 = vpop.f32.mrf.mxu0
        %v951 = vadd.f32 %v763, %v950
        %952 = vmatmul.f32.gmra.mxu0 %v624
        %v953 = vpop.f32.mrf.mxu0
        %v954 = vadd.f32 %v768, %v953
        %955 = vmatmul.f32.gmra.mxu0 %v626
        %v956 = vpop.f32.mrf.mxu0
        %v957 = vadd.f32 %v773, %v956
        %958 = vmatmul.f32.gmra.mxu0 %v628
        %v959 = vpop.f32.mrf.mxu0
        %v960 = vadd.f32 %v778, %v959
        %961 = vmatmul.f32.gmra.mxu0 %v630
        %v962 = vpop.f32.mrf.mxu0
        %v963 = vadd.f32 %v783, %v962
        %964 = vmatmul.f32.gmra.mxu0 %v632
        %v965 = vpop.f32.mrf.mxu0
        %v966 = vadd.f32 %v788, %v965
        %967 = vdwg.mxu0
        %968 = vmatpush.msra.mxu0 0.0
        %969 = vmatpush.msra.mxu0 0.0
        %970 = vmatpush.msra.mxu0 0.0
        %971 = vmatpush.msra.mxu0 0.0
        %972 = vmatpush.msra.mxu0 0.0
        %973 = vmatpush.msra.mxu0 0.0
        %974 = vmatpush.msra.mxu0 %v871
        %975 = vmatpush.msra.mxu0 %v580
        %976 = vmatpush.msra.mxu0 %v579
        %977 = vmatpush.msra.mxu0 %v578
        %978 = vmatpush.msra.mxu0 %v577
        %979 = vmatpush.msra.mxu0 %v576
        %980 = vmatpush.msra.mxu0 %v575
        %981 = vmatpush.msra.mxu0 %v574
        %982 = vmatpush.msra.mxu0 %v573
        %983 = vmatpush.msra.mxu0 %v572
        %984 = vmatmul.f32.gmra.mxu0 %v792
        %v985 = vpop.f32.mrf.mxu0
        %v986 = vadd.f32 %v891, %v985
        %987 = vmatmul.f32.gmra.mxu0 %v795
        %v988 = vpop.f32.mrf.mxu0
        %v989 = vadd.f32 %v894, %v988
        %990 = vmatmul.f32.gmra.mxu0 %v798
        %v991 = vpop.f32.mrf.mxu0
        %v992 = vadd.f32 %v897, %v991
        %993 = vmatmul.f32.gmra.mxu0 %v801
        %v994 = vpop.f32.mrf.mxu0
        %v995 = vadd.f32 %v900, %v994
        %996 = vmatmul.f32.gmra.mxu0 %v804
        %v997 = vpop.f32.mrf.mxu0
        %v998 = vadd.f32 %v903, %v997
        %999 = vmatmul.f32.gmra.mxu0 %v807
        %v1000 = vpop.f32.mrf.mxu0
        %v1001 = vadd.f32 %v906, %v1000
        %1002 = vmatmul.f32.gmra.mxu0 %v810
        %v1003 = vpop.f32.mrf.mxu0
        %v1004 = vadd.f32 %v909, %v1003
        %1005 = vmatmul.f32.gmra.mxu0 %v813
        %v1006 = vpop.f32.mrf.mxu0
        %v1007 = vadd.f32 %v912, %v1006
        %1008 = vmatmul.f32.gmra.mxu0 %v816
        %v1009 = vpop.f32.mrf.mxu0
        %v1010 = vadd.f32 %v915, %v1009
        %1011 = vmatmul.f32.gmra.mxu0 %v819
        %v1012 = vpop.f32.mrf.mxu0
        %v1013 = vadd.f32 %v918, %v1012
        %1014 = vmatmul.f32.gmra.mxu0 %v822
        %v1015 = vpop.f32.mrf.mxu0
        %v1016 = vadd.f32 %v921, %v1015
        %1017 = vmatmul.f32.gmra.mxu0 %v825
        %v1018 = vpop.f32.mrf.mxu0
        %v1019 = vadd.f32 %v924, %v1018
        %1020 = vmatmul.f32.gmra.mxu0 %v828
        %v1021 = vpop.f32.mrf.mxu0
        %v1022 = vadd.f32 %v927, %v1021
        %1023 = vmatmul.f32.gmra.mxu0 %v831
        %v1024 = vpop.f32.mrf.mxu0
        %v1025 = vadd.f32 %v930, %v1024
        %1026 = vmatmul.f32.gmra.mxu0 %v834
        %v1027 = vpop.f32.mrf.mxu0
        %v1028 = vadd.f32 %v933, %v1027
        %1029 = vmatmul.f32.gmra.mxu0 %v837
        %v1030 = vpop.f32.mrf.mxu0
        %v1031 = vadd.f32 %v936, %v1030
        %1032 = vmatmul.f32.gmra.mxu0 %v840
        %v1033 = vpop.f32.mrf.mxu0
        %v1034 = vadd.f32 %v939, %v1033
        %1035 = vmatmul.f32.gmra.mxu0 %v843
        %v1036 = vpop.f32.mrf.mxu0
        %v1037 = vadd.f32 %v942, %v1036
        %1038 = vmatmul.f32.gmra.mxu0 %v846
        %v1039 = vpop.f32.mrf.mxu0
        %v1040 = vadd.f32 %v945, %v1039
        %1041 = vmatmul.f32.gmra.mxu0 %v849
        %v1042 = vpop.f32.mrf.mxu0
        %v1043 = vadd.f32 %v948, %v1042
        %1044 = vmatmul.f32.gmra.mxu0 %v852
        %v1045 = vpop.f32.mrf.mxu0
        %v1046 = vadd.f32 %v951, %v1045
        %1047 = vmatmul.f32.gmra.mxu0 %v855
        %v1048 = vpop.f32.mrf.mxu0
        %v1049 = vadd.f32 %v954, %v1048
        %1050 = vmatmul.f32.gmra.mxu0 %v858
        %v1051 = vpop.f32.mrf.mxu0
        %v1052 = vadd.f32 %v957, %v1051
        %1053 = vmatmul.f32.gmra.mxu0 %v861
        %v1054 = vpop.f32.mrf.mxu0
        %v1055 = vadd.f32 %v960, %v1054
        %1056 = vmatmul.f32.gmra.mxu0 %v864
        %v1057 = vpop.f32.mrf.mxu0
        %v1058 = vadd.f32 %v963, %v1057
        %1059 = vmatmul.f32.gmra.mxu0 %v867
        %v1060 = vpop.f32.mrf.mxu0
        %v1061 = vadd.f32 %v966, %v1060
        %1062 = vdwg.mxu0
        %v1063 = vld [vmem:[%s478] sm:$0xff]
        %v1064 = vld [vmem:[%s478 + $0x8] sm:$0xff]
        %v1065 = vld [vmem:[%s478 + $0x10] sm:$0xff]
        %v1066 = vld [vmem:[%s478 + $0x18] sm:$0xff]
        %v1067 = vld [vmem:[%s478 + $0x20] sm:$0xff]
        %v1068 = vld [vmem:[%s478 + $0x28] sm:$0xff]
        %v1069 = vld [vmem:[%s478 + $0x30] sm:$0xff]
        %v1070 = vld [vmem:[%s478 + $0x38] sm:$0xff]
        %v1071 = vld [vmem:[%s478 + $0x40] sm:$0xff]
        %v1072 = vld [vmem:[%s478 + $0x48] sm:$0xff]
        %v1073 = vld [vmem:[%s478 + $0x50] sm:$0xff]
        %v1074 = vld [vmem:[%s478 + $0x58] sm:$0xff]
        %v1075 = vld [vmem:[%s478 + $0x60] sm:$0xff]
        %v1076 = vld [vmem:[%s478 + $0x68] sm:$0xff]
        %v1077 = vld [vmem:[%s478 + $0x70] sm:$0xff]
        %v1078 = vld [vmem:[%s478 + $0x78] sm:$0xff]
        %v1079 = vld [vmem:[%s478 + $0x80] sm:$0xff]
        %v1080 = vld [vmem:[%s478 + $0x88] sm:$0xff]
        %v1081 = vld [vmem:[%s478 + $0x90] sm:$0xff]
        %v1082 = vld [vmem:[%s478 + $0x98] sm:$0xff]
        %v1083 = vld [vmem:[%s478 + $0xa0] sm:$0xff]
        %v1084 = vld [vmem:[%s478 + $0xa8] sm:$0xff]
        %v1085 = vld [vmem:[%s478 + $0xb0] sm:$0xff]
        %v1086 = vld [vmem:[%s478 + $0xb8] sm:$0xff]
        %v1087 = vld [vmem:[%s478 + $0xc0] sm:$0xff]
        %v1088 = vld [vmem:[%s478 + $0xc8] sm:$0x1]
        %v1089 = vadd.f32 %v986, %v1063
        %v1090 = vadd.f32 %v989, %v1064
        %v1091 = vadd.f32 %v992, %v1065
        %v1092 = vadd.f32 %v995, %v1066
        %v1093 = vadd.f32 %v998, %v1067
        %v1094 = vadd.f32 %v1001, %v1068
        %v1095 = vadd.f32 %v1004, %v1069
        %v1096 = vadd.f32 %v1007, %v1070
        %v1097 = vadd.f32 %v1010, %v1071
        %v1098 = vadd.f32 %v1013, %v1072
        %v1099 = vadd.f32 %v1016, %v1073
        %v1100 = vadd.f32 %v1019, %v1074
        %v1101 = vadd.f32 %v1022, %v1075
        %v1102 = vadd.f32 %v1025, %v1076
        %v1103 = vadd.f32 %v1028, %v1077
        %v1104 = vadd.f32 %v1031, %v1078
        %v1105 = vadd.f32 %v1034, %v1079
        %v1106 = vadd.f32 %v1037, %v1080
        %v1107 = vadd.f32 %v1040, %v1081
        %v1108 = vadd.f32 %v1043, %v1082
        %v1109 = vadd.f32 %v1046, %v1083
        %v1110 = vadd.f32 %v1049, %v1084
        %v1111 = vadd.f32 %v1052, %v1085
        %v1112 = vadd.f32 %v1055, %v1086
        %v1113 = vadd.f32 %v1058, %v1087
        %v1114 = vadd.f32 %v1061, %v1088
        %1115 = vst [vmem:[%s503] sm:$0xff] %v1089
        %1116 = vst [vmem:[%s503 + $0x8] sm:$0xff] %v1090
        %1117 = vst [vmem:[%s503 + $0x10] sm:$0xff] %v1091
        %1118 = vst [vmem:[%s503 + $0x18] sm:$0xff] %v1092
        %1119 = vst [vmem:[%s503 + $0x20] sm:$0xff] %v1093
        %1120 = vst [vmem:[%s503 + $0x28] sm:$0xff] %v1094
        %1121 = vst [vmem:[%s503 + $0x30] sm:$0xff] %v1095
        %1122 = vst [vmem:[%s503 + $0x38] sm:$0xff] %v1096
        %1123 = vst [vmem:[%s503 + $0x40] sm:$0xff] %v1097
        %1124 = vst [vmem:[%s503 + $0x48] sm:$0xff] %v1098
        %1125 = vst [vmem:[%s503 + $0x50] sm:$0xff] %v1099
        %1126 = vst [vmem:[%s503 + $0x58] sm:$0xff] %v1100
        %1127 = vst [vmem:[%s503 + $0x60] sm:$0xff] %v1101
        %1128 = vst [vmem:[%s503 + $0x68] sm:$0xff] %v1102
        %1129 = vst [vmem:[%s503 + $0x70] sm:$0xff] %v1103
        %1130 = vst [vmem:[%s503 + $0x78] sm:$0xff] %v1104
        %1131 = vst [vmem:[%s503 + $0x80] sm:$0xff] %v1105
        %1132 = vst [vmem:[%s503 + $0x88] sm:$0xff] %v1106
        %1133 = vst [vmem:[%s503 + $0x90] sm:$0xff] %v1107
        %1134 = vst [vmem:[%s503 + $0x98] sm:$0xff] %v1108
        %1135 = vst [vmem:[%s503 + $0xa0] sm:$0xff] %v1109
        %1136 = vst [vmem:[%s503 + $0xa8] sm:$0xff] %v1110
        %1137 = vst [vmem:[%s503 + $0xb0] sm:$0xff] %v1111
        %1138 = vst [vmem:[%s503 + $0xb8] sm:$0xff] %v1112
        %1139 = vst [vmem:[%s503 + $0xc0] sm:$0xff] %v1113
        %1140 = vst [vmem:[%s503 + $0xc8] sm:$0x1] %v1114
        %s1141 = sand.u32 %s135, 1
        %s1142 = sand.u32 %s135, 1
        %s1143 = smul.addr %s1142, 208
        %s1144 = scalar_lea.vmem [#allocation4], %s1143
        // Predicated region
        $region113: #{tpu_custom_call.1} parent=103 // pred_check
          %p1145 = pneg %p145
        $region114: #{tpu_custom_call.1} parent=103 // pred_check_branch
          %1147 = sbr.rel (%p1145) target = $region116
        $region115: #{tpu_custom_call.1} parent=103 // pred_region
          %s1148 = smul.addr %s19, 52
          %s1149 = sadd.s32 %s20, %s1148
          %s1150 = smul.addr %s1149, 8
          %s1151 = scalar_lea.vmem %s4, %s1150
          // Predicated region
          $region117: #{tpu_custom_call.1} parent=115 // pred_check
            _
          $region118: #{tpu_custom_call.1} parent=115 // pred_check_branch
            %1153 = sbr.rel (0) target = $region120
          $region119: #{tpu_custom_call.1} parent=115 // pred_region
            // Predicated region
            $region121: #{tpu_custom_call.1} parent=119 // pred_check
              _
            $region122: #{tpu_custom_call.1} parent=119 // pred_check_branch
              %1155 = sbr.rel (0) target = $region124
            $region123: #{tpu_custom_call.1} parent=119 // pred_region
              // Predicated region
              $region136: #{tpu_custom_call.1} parent=123 // pred_check
                _
              $region137: #{tpu_custom_call.1} parent=123 // pred_check_branch
                %1221 = sbr.rel (0) target = $region139
              $region138: #{tpu_custom_call.1} parent=123 // pred_region
                loop: start=0, step=1, limit=1
                $region140: #{tpu_custom_call.1} parent=138 // loop_pre_header
                  _
                $region141: #{tpu_custom_call.1} parent=138 // loop_header
                  %s1223 = sphi 0, %s1227
                  %p1224 = scmp.ge.s32.totalorder %s1223, 1
                  %s1228 = sphi %s1144, %s1144
                  %s1229 = sphi %s1151, %s1151
                $region142: #{tpu_custom_call.1} parent=138 // loop_header_branch
                  %1226 = sbr.rel (%p1224) target = $region146
                $region143: #{tpu_custom_call.1} parent=138 // loop_body
                  %v1230 = vld [vmem:[%s1228] sm:$0xff]
                  %1231 = vst [vmem:[%s1229] sm:$0xff] %v1230
                  %v1232 = vld [vmem:[%s1228 + $0x8] sm:$0xff]
                  %1233 = vst [vmem:[%s1229 + $0x10] sm:$0xff] %v1232
                  %v1234 = vld [vmem:[%s1228 + $0x10] sm:$0xff]
                  %1235 = vst [vmem:[%s1229 + $0x20] sm:$0xff] %v1234
                  %v1236 = vld [vmem:[%s1228 + $0x18] sm:$0xff]
                  %1237 = vst [vmem:[%s1229 + $0x30] sm:$0xff] %v1236
                  %v1238 = vld [vmem:[%s1228 + $0x20] sm:$0xff]
                  %1239 = vst [vmem:[%s1229 + $0x40] sm:$0xff] %v1238
                  %v1240 = vld [vmem:[%s1228 + $0x28] sm:$0xff]
                  %1241 = vst [vmem:[%s1229 + $0x50] sm:$0xff] %v1240
                  %v1242 = vld [vmem:[%s1228 + $0x30] sm:$0xff]
                  %1243 = vst [vmem:[%s1229 + $0x60] sm:$0xff] %v1242
                  %v1244 = vld [vmem:[%s1228 + $0x38] sm:$0xff]
                  %1245 = vst [vmem:[%s1229 + $0x70] sm:$0xff] %v1244
                  %v1246 = vld [vmem:[%s1228 + $0x40] sm:$0xff]
                  %1247 = vst [vmem:[%s1229 + $0x80] sm:$0xff] %v1246
                  %v1248 = vld [vmem:[%s1228 + $0x48] sm:$0xff]
                  %1249 = vst [vmem:[%s1229 + $0x90] sm:$0xff] %v1248
                  %v1250 = vld [vmem:[%s1228 + $0x50] sm:$0xff]
                  %1251 = vst [vmem:[%s1229 + $0xa0] sm:$0xff] %v1250
                  %v1252 = vld [vmem:[%s1228 + $0x58] sm:$0xff]
                  %1253 = vst [vmem:[%s1229 + $0xb0] sm:$0xff] %v1252
                  %v1254 = vld [vmem:[%s1228 + $0x60] sm:$0xff]
                  %1255 = vst [vmem:[%s1229 + $0xc0] sm:$0xff] %v1254
                  %v1256 = vld [vmem:[%s1228 + $0x68] sm:$0xff]
                  %1257 = vst [vmem:[%s1229 + $0xd0] sm:$0xff] %v1256
                  %v1258 = vld [vmem:[%s1228 + $0x70] sm:$0xff]
                  %1259 = vst [vmem:[%s1229 + $0xe0] sm:$0xff] %v1258
                  %v1260 = vld [vmem:[%s1228 + $0x78] sm:$0xff]
                  %1261 = vst [vmem:[%s1229 + $0xf0] sm:$0xff] %v1260
                  %v1262 = vld [vmem:[%s1228 + $0x80] sm:$0xff]
                  %1263 = vst [vmem:[%s1229 + $0x100] sm:$0xff] %v1262
                  %v1264 = vld [vmem:[%s1228 + $0x88] sm:$0xff]
                  %1265 = vst [vmem:[%s1229 + $0x110] sm:$0xff] %v1264
                  %v1266 = vld [vmem:[%s1228 + $0x90] sm:$0xff]
                  %1267 = vst [vmem:[%s1229 + $0x120] sm:$0xff] %v1266
                  %v1268 = vld [vmem:[%s1228 + $0x98] sm:$0xff]
                  %1269 = vst [vmem:[%s1229 + $0x130] sm:$0xff] %v1268
                  %v1270 = vld [vmem:[%s1228 + $0xa0] sm:$0xff]
                  %1271 = vst [vmem:[%s1229 + $0x140] sm:$0xff] %v1270
                  %v1272 = vld [vmem:[%s1228 + $0xa8] sm:$0xff]
                  %1273 = vst [vmem:[%s1229 + $0x150] sm:$0xff] %v1272
                  %v1274 = vld [vmem:[%s1228 + $0xb0] sm:$0xff]
                  %1275 = vst [vmem:[%s1229 + $0x160] sm:$0xff] %v1274
                  %v1276 = vld [vmem:[%s1228 + $0xb8] sm:$0xff]
                  %1277 = vst [vmem:[%s1229 + $0x170] sm:$0xff] %v1276
                  %v1278 = vld [vmem:[%s1228 + $0xc0] sm:$0xff]
                  %1279 = vst [vmem:[%s1229 + $0x180] sm:$0xff] %v1278
                  %v1280 = vld [vmem:[%s1228 + $0xc8] sm:$0xff]
                  %1281 = vst [vmem:[%s1229 + $0x190] sm:$0xff] %v1280
                $region144: #{tpu_custom_call.1} parent=138 // loop_footer
                  %s1227 = sadd.s32 1, %s1223
                $region145: #{tpu_custom_call.1} parent=138 // loop_footer_branch
                  %1222 = sbr.rel target = $region141
                $region146: #{tpu_custom_call.1} parent=138 // loop_exit
                  _
              $region139: #{tpu_custom_call.1} parent=123 // pred_fallthru
                _
              // Predicated region
              $region147: #{tpu_custom_call.1} parent=123 // pred_check
                _
              $region148: #{tpu_custom_call.1} parent=123 // pred_check_branch
                %1283 = sbr.rel target = $region150
              $region149: #{tpu_custom_call.1} parent=123 // pred_region
                _
              $region150: #{tpu_custom_call.1} parent=123 // pred_fallthru
                _
            $region124: #{tpu_custom_call.1} parent=119 // pred_fallthru
              _
            // Predicated region
            $region125: #{tpu_custom_call.1} parent=119 // pred_check
              _
            $region126: #{tpu_custom_call.1} parent=119 // pred_check_branch
              %1157 = sbr.rel target = $region128
            $region127: #{tpu_custom_call.1} parent=119 // pred_region
              %s1159 = ssub.s32 256, 1
              loop: start=0, step=1, limit=1
              $region129: #{tpu_custom_call.1} parent=127 // loop_pre_header
                _
              $region130: #{tpu_custom_call.1} parent=127 // loop_header
                %s1161 = sphi 0, %s1165
                %p1162 = scmp.ge.s32.totalorder %s1161, 1
                %s1166 = sphi %s1144, %s1144
                %s1167 = sphi %s1151, %s1151
              $region131: #{tpu_custom_call.1} parent=127 // loop_header_branch
                %1164 = sbr.rel (%p1162) target = $region135
              $region132: #{tpu_custom_call.1} parent=127 // loop_body
                %v1168 = vld [vmem:[%s1166] sm:%s1159]
                %1169 = vst [vmem:[%s1167] sm:%s1159] %v1168
                %v1170 = vld [vmem:[%s1166 + $0x8] sm:%s1159]
                %1171 = vst [vmem:[%s1167 + $0x10] sm:%s1159] %v1170
                %v1172 = vld [vmem:[%s1166 + $0x10] sm:%s1159]
                %1173 = vst [vmem:[%s1167 + $0x20] sm:%s1159] %v1172
                %v1174 = vld [vmem:[%s1166 + $0x18] sm:%s1159]
                %1175 = vst [vmem:[%s1167 + $0x30] sm:%s1159] %v1174
                %v1176 = vld [vmem:[%s1166 + $0x20] sm:%s1159]
                %1177 = vst [vmem:[%s1167 + $0x40] sm:%s1159] %v1176
                %v1178 = vld [vmem:[%s1166 + $0x28] sm:%s1159]
                %1179 = vst [vmem:[%s1167 + $0x50] sm:%s1159] %v1178
                %v1180 = vld [vmem:[%s1166 + $0x30] sm:%s1159]
                %1181 = vst [vmem:[%s1167 + $0x60] sm:%s1159] %v1180
                %v1182 = vld [vmem:[%s1166 + $0x38] sm:%s1159]
                %1183 = vst [vmem:[%s1167 + $0x70] sm:%s1159] %v1182
                %v1184 = vld [vmem:[%s1166 + $0x40] sm:%s1159]
                %1185 = vst [vmem:[%s1167 + $0x80] sm:%s1159] %v1184
                %v1186 = vld [vmem:[%s1166 + $0x48] sm:%s1159]
                %1187 = vst [vmem:[%s1167 + $0x90] sm:%s1159] %v1186
                %v1188 = vld [vmem:[%s1166 + $0x50] sm:%s1159]
                %1189 = vst [vmem:[%s1167 + $0xa0] sm:%s1159] %v1188
                %v1190 = vld [vmem:[%s1166 + $0x58] sm:%s1159]
                %1191 = vst [vmem:[%s1167 + $0xb0] sm:%s1159] %v1190
                %v1192 = vld [vmem:[%s1166 + $0x60] sm:%s1159]
                %1193 = vst [vmem:[%s1167 + $0xc0] sm:%s1159] %v1192
                %v1194 = vld [vmem:[%s1166 + $0x68] sm:%s1159]
                %1195 = vst [vmem:[%s1167 + $0xd0] sm:%s1159] %v1194
                %v1196 = vld [vmem:[%s1166 + $0x70] sm:%s1159]
                %1197 = vst [vmem:[%s1167 + $0xe0] sm:%s1159] %v1196
                %v1198 = vld [vmem:[%s1166 + $0x78] sm:%s1159]
                %1199 = vst [vmem:[%s1167 + $0xf0] sm:%s1159] %v1198
                %v1200 = vld [vmem:[%s1166 + $0x80] sm:%s1159]
                %1201 = vst [vmem:[%s1167 + $0x100] sm:%s1159] %v1200
                %v1202 = vld [vmem:[%s1166 + $0x88] sm:%s1159]
                %1203 = vst [vmem:[%s1167 + $0x110] sm:%s1159] %v1202
                %v1204 = vld [vmem:[%s1166 + $0x90] sm:%s1159]
                %1205 = vst [vmem:[%s1167 + $0x120] sm:%s1159] %v1204
                %v1206 = vld [vmem:[%s1166 + $0x98] sm:%s1159]
                %1207 = vst [vmem:[%s1167 + $0x130] sm:%s1159] %v1206
                %v1208 = vld [vmem:[%s1166 + $0xa0] sm:%s1159]
                %1209 = vst [vmem:[%s1167 + $0x140] sm:%s1159] %v1208
                %v1210 = vld [vmem:[%s1166 + $0xa8] sm:%s1159]
                %1211 = vst [vmem:[%s1167 + $0x150] sm:%s1159] %v1210
                %v1212 = vld [vmem:[%s1166 + $0xb0] sm:%s1159]
                %1213 = vst [vmem:[%s1167 + $0x160] sm:%s1159] %v1212
                %v1214 = vld [vmem:[%s1166 + $0xb8] sm:%s1159]
                %1215 = vst [vmem:[%s1167 + $0x170] sm:%s1159] %v1214
                %v1216 = vld [vmem:[%s1166 + $0xc0] sm:%s1159]
                %1217 = vst [vmem:[%s1167 + $0x180] sm:%s1159] %v1216
                %v1218 = vld [vmem:[%s1166 + $0xc8] sm:%s1159]
                %1219 = vst [vmem:[%s1167 + $0x190] sm:%s1159] %v1218
              $region133: #{tpu_custom_call.1} parent=127 // loop_footer
                %s1165 = sadd.s32 1, %s1161
              $region134: #{tpu_custom_call.1} parent=127 // loop_footer_branch
                %1160 = sbr.rel target = $region130
              $region135: #{tpu_custom_call.1} parent=127 // loop_exit
                _
            $region128: #{tpu_custom_call.1} parent=119 // pred_fallthru
              _
          $region120: #{tpu_custom_call.1} parent=115 // pred_fallthru
            _
          %1284 = vnop
        $region116: #{tpu_custom_call.1} parent=103 // pred_fallthru
          _
      $region104: #{tpu_custom_call.1} parent=5 // pred_fallthru
        _
      %p1285 = scmp.le.s32.totalorder 2, %s10
      // Predicated region
      $region151: #{tpu_custom_call.1} parent=5 // pred_check
        %p1286 = pneg %p1285
      $region152: #{tpu_custom_call.1} parent=5 // pred_check_branch
        %1288 = sbr.rel (%p1286) target = $region154
      $region153: #{tpu_custom_call.1} parent=5 // pred_region
        %s1289 = ssub.s32 %s10, 2
        // Predicated region
        $region155: #{tpu_custom_call.1} parent=153 // pred_check
          %p1290 = pneg %p151
        $region156: #{tpu_custom_call.1} parent=153 // pred_check_branch
          %1292 = sbr.rel (%p1290) target = $region158
        $region157: #{tpu_custom_call.1} parent=153 // pred_region
          %s1293 = sand.u32 %s136, 1
          %s1294 = sand.u32 %s136, 1
          %s1295 = smul.addr %s1294, 208
          %s1296 = scalar_lea.vmem [#allocation4], %s1295
        $region158: #{tpu_custom_call.1} parent=153 // pred_fallthru
          _
      $region154: #{tpu_custom_call.1} parent=5 // pred_fallthru
        _
    $region6: #{tpu_custom_call.1} parent=1 // loop_footer
      %s14 = sadd.s32 1, %s10
    $region7: #{tpu_custom_call.1} parent=1 // loop_footer_branch
      %9 = sbr.rel target = $region3
    $region8: #{tpu_custom_call.1} parent=1 // loop_exit
      _

</llo_original>
